<compile_context>
chip_gen: v6e
topology: v6e:2x2x1
jax: 0.10.0
libtpu: 0.0.40
codegen_flags: <defaults>
</compile_context>

<pallas_src>
import jax
import jax.numpy as jnp
from jax.experimental import pallas as pl
from jax.experimental.pallas import tpu as pltpu


_HEAD_PAD = 128  # fused head width: col 0 = critic, cols 1..action_n = actor, rest zero


# --------------------------------------------------------------------------- #
# Kernel
# --------------------------------------------------------------------------- #
def _make_kernel(num_layers: int):
    """Kernel closure for `num_layers` (Linear+ReLU) embedding layers + fused head."""

    def kernel(*refs):
        # refs layout:
        #   x_ref,
        #   (w_ref, b_ref) * num_layers,      # W already (in, out); b is (1, out) f32
        #   w_head_ref, b_head_ref,           # fused critic|actor head, lane-padded
        #   out_ref                           # (tile_b, _HEAD_PAD) f32
        x_ref = refs[0]
        layer_refs = refs[1:1 + 2 * num_layers]
        wh_ref = refs[1 + 2 * num_layers]
        bh_ref = refs[2 + 2 * num_layers]
        out_ref = refs[-1]

        h = x_ref[...]                                         # (tile_b, D_in)
        for l in range(num_layers):
            w_ref = layer_refs[2 * l]
            b_ref = layer_refs[2 * l + 1]
            # Keep the MXU on the fast path: re-cast h to the weight dtype
            # (no-op for f32, restores bf16 after the f32 bias/ReLU).
            h = h.astype(w_ref.dtype)
            h = jnp.dot(h, w_ref[...], preferred_element_type=jnp.float32)
            h = jnp.maximum(h + b_ref[...], 0.0)               # bias + ReLU in f32

        # Single lane-dense head matmul (critic col 0, actor cols 1..action_n).
        h = h.astype(wh_ref.dtype)
        out_ref[...] = (
            jnp.dot(h, wh_ref[...], preferred_element_type=jnp.float32) + bh_ref[...]
        )

    return kernel


# --------------------------------------------------------------------------- #
# One-time parameter packing (transpose / fuse / pad — NOT on the hot path)
# --------------------------------------------------------------------------- #
def pack_params(params, action_n, dtype=jnp.float32):
    """Transpose weights to (in, out) in `dtype`, keep biases f32 as (1, out),
    and fuse critic + actor heads into one lane-padded (hidden, 128) matrix."""
    packed = []
    for (w, b) in params["emb"]:
        packed.append(jnp.asarray(w, dtype).T)                       # (in, out)
        packed.append(jnp.asarray(b, jnp.float32).reshape(1, -1))    # (1, out) f32

    wc, bc = params["critic"]
    wa, ba = params["actor"]
    hidden = wc.shape[1]
    assert 1 + action_n <= _HEAD_PAD, "action space too large for fused 128-lane head"

    w_head = jnp.zeros((hidden, _HEAD_PAD), dtype)
    w_head = w_head.at[:, 0:1].set(jnp.asarray(wc, dtype).T)
    w_head = w_head.at[:, 1:1 + action_n].set(jnp.asarray(wa, dtype).T)

    b_head = jnp.zeros((1, _HEAD_PAD), jnp.float32)
    b_head = b_head.at[0, 0:1].set(jnp.asarray(bc, jnp.float32).reshape(1))
    b_head = b_head.at[0, 1:1 + action_n].set(jnp.asarray(ba, jnp.float32))

    return tuple(packed) + (w_head, b_head)


# --------------------------------------------------------------------------- #
# Jitted batched forward builder
# --------------------------------------------------------------------------- #
def _build_forward(num_layers, d_in, action_n, tb, dtype=jnp.float32):
    kernel = _make_kernel(num_layers)
    sub = 16 if dtype == jnp.bfloat16 else 8   # sublane multiple for the x/out tiles

    def fwd(xb, *packed):
        B = xb.shape[0]                                        # static under jit
        xb = xb.reshape(B, d_in).astype(dtype)

        # Tile selection (no host-side padding of the batch):
        #  * B <= tb        -> one grid step, tile == whole batch (block dim equals
        #                      the full array dim, so any B is legal)
        #  * tb < B <= 2*tb -> two balanced tiles (lets v7x shard on both TCs)
        #  * B > 2*tb       -> tb-row tiles; ragged last tile masked by Pallas
        if B <= tb:
            tile_b = B
        elif B <= 2 * tb:
            half = (B + 1) // 2
            tile_b = min(tb, ((half + sub - 1) // sub) * sub)
        else:
            tile_b = tb
        grid = (pl.cdiv(B, tile_b),)

        in_specs = [pl.BlockSpec((tile_b, d_in), lambda i: (i, 0))]
        for arr in packed:
            # Constant block index -> weight DMA'd once, stays VMEM-resident
            # across all batch-tile grid steps. (Optionally single-buffer via
            # pipeline_mode=pl.Buffered(1); left default here, footprint ~KBs.)
            in_specs.append(pl.BlockSpec(arr.shape, lambda i: (0, 0)))
        out_specs = pl.BlockSpec((tile_b, _HEAD_PAD), lambda i: (i, 0))

        # Rough VMEM estimate; only raise the scoped limit if a huge tile
        # would blow past the conservative 16 MiB default (v5e).
        est = 2 * tile_b * d_in * jnp.dtype(dtype).itemsize            # x (dbl buf)
        est += 2 * tile_b * _HEAD_PAD * 4                               # out (dbl buf)
        est += 2 * sum(int(a.size) * a.dtype.itemsize for a in packed)  # weights
        cp_kwargs = dict(dimension_semantics=("parallel",))
        if est > (16 << 20):
            cp_kwargs["vmem_limit_bytes"] = int(min(est * 3 // 2, 100 << 20))

        out = pl.pallas_call(
            kernel,
            out_shape=jax.ShapeDtypeStruct((B, _HEAD_PAD), jnp.float32),
            grid=grid,
            in_specs=in_specs,
            out_specs=out_specs,
            compiler_params=pltpu.CompilerParams(**cp_kwargs),
        )(xb, *packed)

        critic = out[:, 0:1]                                   # (B, 1)
        actor = out[:, 1:1 + action_n]                         # (B, action_n)
        return critic, actor

    return jax.jit(fwd)


class ActorCriticRamPallas:
    """Holds pre-packed parameters and the jitted Pallas forward."""

    def __init__(self, params, num_inputs, action_n, tb=None, dtype=jnp.float32):
        # dtype=jnp.bfloat16 halves weight/x HBM traffic and uses the fast bf16
        # MXU path on v5e/v6e/v7x (f32 accumulate kept via preferred_element_type);
        # default f32 matches torch numerics exactly.
        self.d_in = 128 * num_inputs
        self.action_n = action_n
        self.dtype = dtype
        self.tb = tb if tb is not None else (256 if dtype == jnp.bfloat16 else 128)
        self.num_layers = len(params["emb"])
        self.packed = pack_params(params, action_n, dtype)
        self._fwd = _build_forward(self.num_layers, self.d_in, action_n,
                                   self.tb, dtype)

    def forward_batched(self, xb):
        """xb: (B, ...) with prod(trailing dims) == 128*num_inputs.
        Returns (critic (B,1), actor (B,action_n))."""
        B = xb.shape[0]
        flat = int(jnp.size(xb)) // B
        assert flat == self.d_in, f"expected flat dim {self.d_in}, got {flat}"
        return self._fwd(xb.reshape(B, self.d_in), *self.packed)

    def forward(self, x):
        """Exact torch semantics: flatten(x) -> (critic (1,), actor (action_n,)).
        Dispatch/weight-DMA bound by nature; use forward_batched for throughput."""
        assert int(jnp.size(x)) == self.d_in, (
            f"expected {self.d_in} elements, got {int(jnp.size(x))}")
        critic, actor = self.forward_batched(x.reshape(1, self.d_in))
        return critic[0], actor[0]


# --------------------------------------------------------------------------- #
# Init + pure-JAX reference (torch layout: W is (out, in))
# --------------------------------------------------------------------------- #
def init_params(key, num_inputs, action_n, num_layers=1, hidden_size=512):
    """Kaiming-normal (fan_in, relu), zero biases — matches weights_init."""

    def kaiming(key, out_f, in_f):
        std = (2.0 / in_f) ** 0.5
        return std * jax.random.normal(key, (out_f, in_f), dtype=jnp.float32)

    keys = jax.random.split(key, num_layers + 2)
    emb = []
    in_f = 128 * num_inputs
    for l in range(num_layers):
        emb.append((kaiming(keys[l], hidden_size, in_f),
                    jnp.zeros((hidden_size,), jnp.float32)))
        in_f = hidden_size
    wc = kaiming(keys[num_layers], 1, hidden_size)
    bc = jnp.zeros((1,), jnp.float32)
    wa = kaiming(keys[num_layers + 1], action_n, hidden_size)
    ba = jnp.zeros((action_n,), jnp.float32)
    return {"emb": emb, "critic": (wc, bc), "actor": (wa, ba)}


def reference_forward(x, params):
    emb = x.reshape(-1)
    for (w, b) in params["emb"]:
        emb = jnp.maximum(emb @ w.T + b, 0.0)
    wc, bc = params["critic"]
    wa, ba = params["actor"]
    return emb @ wc.T + bc, emb @ wa.T + ba


# TODO(synk): save()/load()/name() are filesystem I/O, intentionally not ported.

if __name__ == "__main__":
    # Module-default small shapes: num_inputs=4 -> flat dim 512, num_layers=1,
    # hidden_size=512, action_space.n=6.
    num_inputs = 4
    action_n = 6
    num_layers = 1
    hidden_size = 512

    key = jax.random.PRNGKey(0)
    k_x, k_xb, k_xl, k_p = jax.random.split(key, 4)
    params = init_params(k_p, num_inputs, action_n, num_layers, hidden_size)

    model = ActorCriticRamPallas(params, num_inputs, action_n)   # f32, tb=128

    # --- single observation (exact torch semantics) -------------------------
    x = jax.random.normal(k_x, (num_inputs, 128), dtype=jnp.float32)
    critic, actor = model.forward(x)
    critic = jax.block_until_ready(critic)
    actor = jax.block_until_ready(actor)

    critic_ref, actor_ref = reference_forward(x, params)
    assert critic.shape == (1,) and actor.shape == (action_n,)
    assert jnp.allclose(critic, critic_ref, atol=1e-4, rtol=1e-4)
    assert jnp.allclose(actor, actor_ref, atol=1e-4, rtol=1e-4)

    # --- small batch: single grid step, tile == whole batch (B=20, no pad) ---
    B_small = 20
    xb = jax.random.normal(k_xb, (B_small, num_inputs, 128), dtype=jnp.float32)
    critic_b, actor_b = model.forward_batched(xb)
    critic_b = jax.block_until_ready(critic_b)
    actor_b = jax.block_until_ready(actor_b)

    ref_b = jax.vmap(lambda xi: reference_forward(xi, params))(xb)
    assert critic_b.shape == (B_small, 1) and actor_b.shape == (B_small, action_n)
    assert jnp.allclose(critic_b, ref_b[0], atol=1e-4, rtol=1e-4)
    assert jnp.allclose(actor_b, ref_b[1], atol=1e-4, rtol=1e-4)

    # --- larger batch: two balanced tiles (v7x megacore path), no host pad ---
    B_large = 160
    xl = jax.random.normal(k_xl, (B_large, num_inputs, 128), dtype=jnp.float32)
    critic_l, actor_l = model.forward_batched(xl)
    critic_l = jax.block_until_ready(critic_l)
    actor_l = jax.block_until_ready(actor_l)

    ref_l = jax.vmap(lambda xi: reference_forward(xi, params))(xl)
    assert critic_l.shape == (B_large, 1) and actor_l.shape == (B_large, action_n)
    assert jnp.allclose(critic_l, ref_l[0], atol=1e-4, rtol=1e-4)
    assert jnp.allclose(actor_l, ref_l[1], atol=1e-4, rtol=1e-4)

    # --- bf16 data path (fast MXU path; f32 accumulate), loose tolerance -----
    model_bf16 = ActorCriticRamPallas(params, num_inputs, action_n,
                                      dtype=jnp.bfloat16)          # tb=256
    critic_h, actor_h = model_bf16.forward_batched(xl)
    critic_h = jax.block_until_ready(critic_h)
    actor_h = jax.block_until_ready(actor_h)
    assert critic_h.shape == (B_large, 1) and actor_h.shape == (B_large, action_n)
    assert bool(jnp.all(jnp.isfinite(critic_h))) and bool(jnp.all(jnp.isfinite(actor_h)))
    assert jnp.allclose(critic_h, ref_l[0], atol=0.2, rtol=0.05)
    assert jnp.allclose(actor_h, ref_l[1], atol=0.2, rtol=0.05)

    print("KERNEL_OK")
</pallas_src>

<mosaic_0001>
module attributes {stable_mosaic.version = 11 : i64} {
  func.func @kernel(%arg0: i32, %arg1: memref<1x512xf32, #tpu.memory_space<vmem>>, %arg2: memref<512x512xf32, #tpu.memory_space<vmem>>, %arg3: memref<1x512xf32, #tpu.memory_space<vmem>>, %arg4: memref<512x128xf32, #tpu.memory_space<vmem>>, %arg5: memref<1x128xf32, #tpu.memory_space<vmem>>, %arg6: memref<1x128xf32, #tpu.memory_space<vmem>>) attributes {dimension_semantics = [#tpu.dimension_semantics<parallel>], iteration_bounds = array<i64: 1>, scalar_prefetch = 0 : i64, scratch_operands = 0 : i64, tpu.core_type = #tpu.core_type<tc>, window_params = [{transform_indices = @transform_0, window_bounds = array<i64: 1, 512>}, {pipeline_mode = #tpu.pipeline_mode<synchronous>, transform_indices = @transform_1, window_bounds = array<i64: 512, 512>}, {pipeline_mode = #tpu.pipeline_mode<synchronous>, transform_indices = @transform_2, window_bounds = array<i64: 1, 512>}, {pipeline_mode = #tpu.pipeline_mode<synchronous>, transform_indices = @transform_3, window_bounds = array<i64: 512, 128>}, {pipeline_mode = #tpu.pipeline_mode<synchronous>, transform_indices = @transform_4, window_bounds = array<i64: 1, 128>}, {transform_indices = @transform_5, window_bounds = array<i64: 1, 128>}]} {
    %c0 = arith.constant 0 : index
    %c0_0 = arith.constant 0 : index
    %0 = vector.load %arg1[%c0, %c0_0] : memref<1x512xf32, #tpu.memory_space<vmem>>, vector<1x512xf32>
    %c0_1 = arith.constant 0 : index
    %c0_2 = arith.constant 0 : index
    %1 = vector.load %arg2[%c0_1, %c0_2] : memref<512x512xf32, #tpu.memory_space<vmem>>, vector<512x512xf32>
    %cst = arith.constant dense<0.000000e+00> : vector<1x512xf32>
    %2 = tpu.matmul %0, %1, %cst {dimension_numbers = #tpu.dot_dimension_numbers<[1], [0], [0], [1], [0, 0, 1, 1], [], []>} : vector<1x512xf32>, vector<512x512xf32>, vector<1x512xf32> -> vector<1x512xf32>
    %c0_3 = arith.constant 0 : index
    %c0_4 = arith.constant 0 : index
    %3 = vector.load %arg3[%c0_3, %c0_4] : memref<1x512xf32, #tpu.memory_space<vmem>>, vector<1x512xf32>
    %4 = arith.addf %2, %3 : vector<1x512xf32>
    %cst_5 = arith.constant 0.000000e+00 : f32
    %5 = vector.broadcast %cst_5 : f32 to vector<1x512xf32>
    %6 = arith.maximumf %4, %5 : vector<1x512xf32>
    %c0_6 = arith.constant 0 : index
    %c0_7 = arith.constant 0 : index
    %7 = vector.load %arg4[%c0_6, %c0_7] : memref<512x128xf32, #tpu.memory_space<vmem>>, vector<512x128xf32>
    %cst_8 = arith.constant dense<0.000000e+00> : vector<1x128xf32>
    %8 = tpu.matmul %6, %7, %cst_8 {dimension_numbers = #tpu.dot_dimension_numbers<[1], [0], [0], [1], [0, 0, 1, 1], [], []>} : vector<1x512xf32>, vector<512x128xf32>, vector<1x128xf32> -> vector<1x128xf32>
    %c0_9 = arith.constant 0 : index
    %c0_10 = arith.constant 0 : index
    %9 = vector.load %arg5[%c0_9, %c0_10] : memref<1x128xf32, #tpu.memory_space<vmem>>, vector<1x128xf32>
    %10 = arith.addf %8, %9 : vector<1x128xf32>
    %c0_11 = arith.constant 0 : index
    %c0_12 = arith.constant 0 : index
    %11 = vector.load %arg6[%c0_11, %c0_12] : memref<1x128xf32, #tpu.memory_space<vmem>>, vector<1x128xf32>
    tpu.vector_store %arg6[%c0_11, %c0_12], %10 {strides = array<i32>} : memref<1x128xf32, #tpu.memory_space<vmem>>, vector<1x128xf32>,
    return
  }
  func.func @transform_0(%arg0: i32) -> (i32, i32) {
    %c0_i32 = arith.constant 0 : i32
    %c0_i32_0 = arith.constant 0 : i32
    return %arg0, %c0_i32 : i32, i32
  }
  func.func @transform_1(%arg0: i32) -> (i32, i32) {
    %c0_i32 = arith.constant 0 : i32
    %c0_i32_0 = arith.constant 0 : i32
    %c0_i32_1 = arith.constant 0 : i32
    return %c0_i32, %c0_i32_0 : i32, i32
  }
  func.func @transform_2(%arg0: i32) -> (i32, i32) {
    %c0_i32 = arith.constant 0 : i32
    %c0_i32_0 = arith.constant 0 : i32
    %c0_i32_1 = arith.constant 0 : i32
    return %c0_i32, %c0_i32_0 : i32, i32
  }
  func.func @transform_3(%arg0: i32) -> (i32, i32) {
    %c0_i32 = arith.constant 0 : i32
    %c0_i32_0 = arith.constant 0 : i32
    %c0_i32_1 = arith.constant 0 : i32
    return %c0_i32, %c0_i32_0 : i32, i32
  }
  func.func @transform_4(%arg0: i32) -> (i32, i32) {
    %c0_i32 = arith.constant 0 : i32
    %c0_i32_0 = arith.constant 0 : i32
    %c0_i32_1 = arith.constant 0 : i32
    return %c0_i32, %c0_i32_0 : i32, i32
  }
  func.func @transform_5(%arg0: i32) -> (i32, i32) {
    %c0_i32 = arith.constant 0 : i32
    %c0_i32_0 = arith.constant 0 : i32
    return %arg0, %c0_i32 : i32, i32
  }
}

</mosaic_0001>

<llo_original>
// kernel: fwd.1
$region0: #{fwd.1}
  #allocation0 [shape = 'u32[]', space=smem, size = 0x4, offset = 0x4, fixed_abs, tag = 'smem constant byte address 0x4 - core index']
  #allocation1 [shape = 'u32[144,128]{1,0:T(1,128)}', space=vmem, size = 0x12000, scoped, tag = 'internal scratch']
  %s0 = inlined_call_operand.hbm [shape: f32[1,512], index: 0, kind: input, shape index: {}]
  %s1 = inlined_call_operand.hbm [shape: f32[512,512], index: 1, kind: input, shape index: {}]
  %s2 = inlined_call_operand.hbm [shape: f32[1,512], index: 2, kind: input, shape index: {}]
  %s3 = inlined_call_operand.hbm [shape: f32[512,128], index: 3, kind: input, shape index: {}]
  %s4 = inlined_call_operand.vmem [shape: f32[1,128], index: 4, kind: input, shape index: {}]
  %s5 = inlined_call_operand.vmem [shape: f32[1,128], index: 5, kind: output, shape index: {}]
  %s6 = sld [smem:[#allocation0]]
  $region46: #{fwd.1} parent=0
    _
  %s8 = ssub.s32 1, %s6
  %s9 = scalar_select 0, %s8, %s6
  $region1: #{fwd.1} parent=0
    #allocation2 [shape = 'u8[2048]{0}', space=vmem, size = 0x800, scoped, tag = 'input window, operand 0, single buffered']
    #allocation3 [shape = 's32[1]{0}', space=sflag, size = 0x4, scoped, tag = 'scoped memory for fwd.1']
    #allocation4 [shape = 'u8[1048576]{0}', space=vmem, size = 0x100000, scoped, tag = 'input window, operand 1, single buffered']
    #allocation5 [shape = 's32[1]{0}', space=sflag, size = 0x4, scoped, tag = 'scoped memory for fwd.1']
    #allocation6 [shape = 'u8[2048]{0}', space=vmem, size = 0x800, scoped, tag = 'input window, operand 2, single buffered']
    #allocation7 [shape = 'u8[262144]{0}', space=vmem, size = 0x40000, scoped, tag = 'input window, operand 3, single buffered']
    #allocation8 [shape = 's32[1]{0}', space=sflag, size = 0x4, scoped, tag = 'scoped memory for fwd.1']
    %10 = vsyncpa [#allocation3], 0
    %11 = vsyncpa [#allocation5], 0
    %12 = vsyncpa [#allocation8], 0
    // Predicated region
    $region2: #{fwd.1} parent=1 // pred_check
      _
    $region3: #{fwd.1} parent=1 // pred_check_branch
      %14 = sbr.rel (0) target = $region5
    $region4: #{fwd.1} parent=1 // pred_region
      %s16 = ssub.s32 64, 64
      %17 = vsyncadd [#allocation3], %s16
      %s19 = sshll.u32 [#allocation2], 4
      %s20 = int_to_ptr.vmem [resolvable:$true] %s19
      %22 = dma.hbm_to_vmem [thread:$0]  %s0, 64, %s20, [#allocation3]
    $region5: #{fwd.1} parent=1 // pred_fallthru
      _
    // Predicated region
    $region6: #{fwd.1} parent=1 // pred_check
      _
    $region7: #{fwd.1} parent=1 // pred_check_branch
      %24 = sbr.rel (0) target = $region9
    $region8: #{fwd.1} parent=1 // pred_region
      %s26 = ssub.s32 32768, 32768
      %27 = vsyncadd [#allocation5], %s26
      %s28 = sshll.u32 [#allocation4], 4
      %s29 = int_to_ptr.vmem [resolvable:$true] %s28
      %34 = dma.hbm_to_vmem [thread:$0]  %s1, 32768, %s29, [#allocation5], 512, 512, 32
    $region9: #{fwd.1} parent=1 // pred_fallthru
      _
    // Predicated region
    $region10: #{fwd.1} parent=1 // pred_check
      _
    $region11: #{fwd.1} parent=1 // pred_check_branch
      %36 = sbr.rel (0) target = $region13
    $region12: #{fwd.1} parent=1 // pred_region
      %s38 = ssub.s32 64, 64
      %39 = vsyncadd [#allocation5], %s38
      %s41 = sshll.u32 [#allocation6], 4
      %s42 = int_to_ptr.vmem [resolvable:$true] %s41
      %44 = dma.hbm_to_vmem [thread:$0]  %s2, 64, %s42, [#allocation5]
    $region13: #{fwd.1} parent=1 // pred_fallthru
      _
    // Predicated region
    $region14: #{fwd.1} parent=1 // pred_check
      _
    $region15: #{fwd.1} parent=1 // pred_check_branch
      %46 = sbr.rel (0) target = $region17
    $region16: #{fwd.1} parent=1 // pred_region
      %s48 = ssub.s32 8192, 8192
      %49 = vsyncadd [#allocation8], %s48
      %s50 = sshll.u32 [#allocation7], 4
      %s51 = int_to_ptr.vmem [resolvable:$true] %s50
      %56 = dma.hbm_to_vmem [thread:$0]  %s3, 8192, %s51, [#allocation8], 128, 128, 8
    $region17: #{fwd.1} parent=1 // pred_fallthru
      _
    // Predicated region
    $region18: #{fwd.1} parent=1 // pred_check
      _
    $region19: #{fwd.1} parent=1 // pred_check_branch
      %58 = sbr.rel (0) target = $region21
    $region20: #{fwd.1} parent=1 // pred_region
      _
    $region21: #{fwd.1} parent=1 // pred_fallthru
      _
    // Predicated region
    $region22: #{fwd.1} parent=1 // pred_check
      _
    $region23: #{fwd.1} parent=1 // pred_check_branch
      %60 = sbr.rel (0) target = $region25
    $region24: #{fwd.1} parent=1 // pred_region
      %61 = dma.done [#allocation3], 64
    $region25: #{fwd.1} parent=1 // pred_fallthru
      _
    // Predicated region
    $region26: #{fwd.1} parent=1 // pred_check
      _
    $region27: #{fwd.1} parent=1 // pred_check_branch
      %63 = sbr.rel (0) target = $region29
    $region28: #{fwd.1} parent=1 // pred_region
      %64 = dma.done [#allocation5], 32768
    $region29: #{fwd.1} parent=1 // pred_fallthru
      _
    // Predicated region
    $region30: #{fwd.1} parent=1 // pred_check
      _
    $region31: #{fwd.1} parent=1 // pred_check_branch
      %66 = sbr.rel (0) target = $region33
    $region32: #{fwd.1} parent=1 // pred_region
      %67 = dma.done [#allocation5], 64
    $region33: #{fwd.1} parent=1 // pred_fallthru
      _
    // Predicated region
    $region34: #{fwd.1} parent=1 // pred_check
      _
    $region35: #{fwd.1} parent=1 // pred_check_branch
      %69 = sbr.rel (0) target = $region37
    $region36: #{fwd.1} parent=1 // pred_region
      %70 = dma.done [#allocation8], 8192
    $region37: #{fwd.1} parent=1 // pred_fallthru
      _
    %v71 = vld [vmem:[#allocation2] sm:$0xf]
    %v72 = vld [vmem:[#allocation4] sm:$0xff]
    %v73 = vld [vmem:[#allocation4 + $0x8] sm:$0xff]
    %v74 = vld [vmem:[#allocation4 + $0x10] sm:$0xff]
    %v75 = vld [vmem:[#allocation4 + $0x18] sm:$0xff]
    %v76 = vld [vmem:[#allocation4 + $0x20] sm:$0xff]
    %v77 = vld [vmem:[#allocation4 + $0x28] sm:$0xff]
    %v78 = vld [vmem:[#allocation4 + $0x30] sm:$0xff]
    %v79 = vld [vmem:[#allocation4 + $0x38] sm:$0xff]
    %v80 = vld [vmem:[#allocation4 + $0x40] sm:$0xff]
    %v81 = vld [vmem:[#allocation4 + $0x48] sm:$0xff]
    %v82 = vld [vmem:[#allocation4 + $0x50] sm:$0xff]
    %v83 = vld [vmem:[#allocation4 + $0x58] sm:$0xff]
    %v84 = vld [vmem:[#allocation4 + $0x60] sm:$0xff]
    %v85 = vld [vmem:[#allocation4 + $0x68] sm:$0xff]
    %v86 = vld [vmem:[#allocation4 + $0x70] sm:$0xff]
    %v87 = vld [vmem:[#allocation4 + $0x78] sm:$0xff]
    %v88 = vld [vmem:[#allocation4 + $0x80] sm:$0xff]
    %v89 = vld [vmem:[#allocation4 + $0x88] sm:$0xff]
    %v90 = vld [vmem:[#allocation4 + $0x90] sm:$0xff]
    %v91 = vld [vmem:[#allocation4 + $0x98] sm:$0xff]
    %v92 = vld [vmem:[#allocation4 + $0xa0] sm:$0xff]
    %v93 = vld [vmem:[#allocation4 + $0xa8] sm:$0xff]
    %v94 = vld [vmem:[#allocation4 + $0xb0] sm:$0xff]
    %v95 = vld [vmem:[#allocation4 + $0xb8] sm:$0xff]
    %v96 = vld [vmem:[#allocation4 + $0xc0] sm:$0xff]
    %v97 = vld [vmem:[#allocation4 + $0xc8] sm:$0xff]
    %v98 = vld [vmem:[#allocation4 + $0xd0] sm:$0xff]
    %v99 = vld [vmem:[#allocation4 + $0xd8] sm:$0xff]
    %v100 = vld [vmem:[#allocation4 + $0xe0] sm:$0xff]
    %v101 = vld [vmem:[#allocation4 + $0xe8] sm:$0xff]
    %v102 = vld [vmem:[#allocation4 + $0xf0] sm:$0xff]
    %v103 = vld [vmem:[#allocation4 + $0xf8] sm:$0xff]
    %v104 = vld [vmem:[#allocation4 + $0x100] sm:$0xff]
    %v105 = vld [vmem:[#allocation4 + $0x108] sm:$0xff]
    %v106 = vld [vmem:[#allocation4 + $0x110] sm:$0xff]
    %v107 = vld [vmem:[#allocation4 + $0x118] sm:$0xff]
    %v108 = vld [vmem:[#allocation4 + $0x120] sm:$0xff]
    %v109 = vld [vmem:[#allocation4 + $0x128] sm:$0xff]
    %v110 = vld [vmem:[#allocation4 + $0x130] sm:$0xff]
    %v111 = vld [vmem:[#allocation4 + $0x138] sm:$0xff]
    %v112 = vld [vmem:[#allocation4 + $0x140] sm:$0xff]
    %v113 = vld [vmem:[#allocation4 + $0x148] sm:$0xff]
    %v114 = vld [vmem:[#allocation4 + $0x150] sm:$0xff]
    %v115 = vld [vmem:[#allocation4 + $0x158] sm:$0xff]
    %v116 = vld [vmem:[#allocation4 + $0x160] sm:$0xff]
    %v117 = vld [vmem:[#allocation4 + $0x168] sm:$0xff]
    %v118 = vld [vmem:[#allocation4 + $0x170] sm:$0xff]
    %v119 = vld [vmem:[#allocation4 + $0x178] sm:$0xff]
    %v120 = vld [vmem:[#allocation4 + $0x180] sm:$0xff]
    %v121 = vld [vmem:[#allocation4 + $0x188] sm:$0xff]
    %v122 = vld [vmem:[#allocation4 + $0x190] sm:$0xff]
    %v123 = vld [vmem:[#allocation4 + $0x198] sm:$0xff]
    %v124 = vld [vmem:[#allocation4 + $0x1a0] sm:$0xff]
    %v125 = vld [vmem:[#allocation4 + $0x1a8] sm:$0xff]
    %v126 = vld [vmem:[#allocation4 + $0x1b0] sm:$0xff]
    %v127 = vld [vmem:[#allocation4 + $0x1b8] sm:$0xff]
    %v128 = vld [vmem:[#allocation4 + $0x1c0] sm:$0xff]
    %v129 = vld [vmem:[#allocation4 + $0x1c8] sm:$0xff]
    %v130 = vld [vmem:[#allocation4 + $0x1d0] sm:$0xff]
    %v131 = vld [vmem:[#allocation4 + $0x1d8] sm:$0xff]
    %v132 = vld [vmem:[#allocation4 + $0x1e0] sm:$0xff]
    %v133 = vld [vmem:[#allocation4 + $0x1e8] sm:$0xff]
    %v134 = vld [vmem:[#allocation4 + $0x1f0] sm:$0xff]
    %v135 = vld [vmem:[#allocation4 + $0x1f8] sm:$0xff]
    %v136 = vld [vmem:[#allocation4 + $0x200] sm:$0xff]
    %v137 = vld [vmem:[#allocation4 + $0x208] sm:$0xff]
    %v138 = vld [vmem:[#allocation4 + $0x210] sm:$0xff]
    %v139 = vld [vmem:[#allocation4 + $0x218] sm:$0xff]
    %v140 = vld [vmem:[#allocation4 + $0x220] sm:$0xff]
    %v141 = vld [vmem:[#allocation4 + $0x228] sm:$0xff]
    %v142 = vld [vmem:[#allocation4 + $0x230] sm:$0xff]
    %v143 = vld [vmem:[#allocation4 + $0x238] sm:$0xff]
    %v144 = vld [vmem:[#allocation4 + $0x240] sm:$0xff]
    %v145 = vld [vmem:[#allocation4 + $0x248] sm:$0xff]
    %v146 = vld [vmem:[#allocation4 + $0x250] sm:$0xff]
    %v147 = vld [vmem:[#allocation4 + $0x258] sm:$0xff]
    %v148 = vld [vmem:[#allocation4 + $0x260] sm:$0xff]
    %v149 = vld [vmem:[#allocation4 + $0x268] sm:$0xff]
    %v150 = vld [vmem:[#allocation4 + $0x270] sm:$0xff]
    %v151 = vld [vmem:[#allocation4 + $0x278] sm:$0xff]
    %v152 = vld [vmem:[#allocation4 + $0x280] sm:$0xff]
    %v153 = vld [vmem:[#allocation4 + $0x288] sm:$0xff]
    %v154 = vld [vmem:[#allocation4 + $0x290] sm:$0xff]
    %v155 = vld [vmem:[#allocation4 + $0x298] sm:$0xff]
    %v156 = vld [vmem:[#allocation4 + $0x2a0] sm:$0xff]
    %v157 = vld [vmem:[#allocation4 + $0x2a8] sm:$0xff]
    %v158 = vld [vmem:[#allocation4 + $0x2b0] sm:$0xff]
    %v159 = vld [vmem:[#allocation4 + $0x2b8] sm:$0xff]
    %v160 = vld [vmem:[#allocation4 + $0x2c0] sm:$0xff]
    %v161 = vld [vmem:[#allocation4 + $0x2c8] sm:$0xff]
    %v162 = vld [vmem:[#allocation4 + $0x2d0] sm:$0xff]
    %v163 = vld [vmem:[#allocation4 + $0x2d8] sm:$0xff]
    %v164 = vld [vmem:[#allocation4 + $0x2e0] sm:$0xff]
    %v165 = vld [vmem:[#allocation4 + $0x2e8] sm:$0xff]
    %v166 = vld [vmem:[#allocation4 + $0x2f0] sm:$0xff]
    %v167 = vld [vmem:[#allocation4 + $0x2f8] sm:$0xff]
    %v168 = vld [vmem:[#allocation4 + $0x300] sm:$0xff]
    %v169 = vld [vmem:[#allocation4 + $0x308] sm:$0xff]
    %v170 = vld [vmem:[#allocation4 + $0x310] sm:$0xff]
    %v171 = vld [vmem:[#allocation4 + $0x318] sm:$0xff]
    %v172 = vld [vmem:[#allocation4 + $0x320] sm:$0xff]
    %v173 = vld [vmem:[#allocation4 + $0x328] sm:$0xff]
    %v174 = vld [vmem:[#allocation4 + $0x330] sm:$0xff]
    %v175 = vld [vmem:[#allocation4 + $0x338] sm:$0xff]
    %v176 = vld [vmem:[#allocation4 + $0x340] sm:$0xff]
    %v177 = vld [vmem:[#allocation4 + $0x348] sm:$0xff]
    %v178 = vld [vmem:[#allocation4 + $0x350] sm:$0xff]
    %v179 = vld [vmem:[#allocation4 + $0x358] sm:$0xff]
    %v180 = vld [vmem:[#allocation4 + $0x360] sm:$0xff]
    %v181 = vld [vmem:[#allocation4 + $0x368] sm:$0xff]
    %v182 = vld [vmem:[#allocation4 + $0x370] sm:$0xff]
    %v183 = vld [vmem:[#allocation4 + $0x378] sm:$0xff]
    %v184 = vld [vmem:[#allocation4 + $0x380] sm:$0xff]
    %v185 = vld [vmem:[#allocation4 + $0x388] sm:$0xff]
    %v186 = vld [vmem:[#allocation4 + $0x390] sm:$0xff]
    %v187 = vld [vmem:[#allocation4 + $0x398] sm:$0xff]
    %v188 = vld [vmem:[#allocation4 + $0x3a0] sm:$0xff]
    %v189 = vld [vmem:[#allocation4 + $0x3a8] sm:$0xff]
    %v190 = vld [vmem:[#allocation4 + $0x3b0] sm:$0xff]
    %v191 = vld [vmem:[#allocation4 + $0x3b8] sm:$0xff]
    %v192 = vld [vmem:[#allocation4 + $0x3c0] sm:$0xff]
    %v193 = vld [vmem:[#allocation4 + $0x3c8] sm:$0xff]
    %v194 = vld [vmem:[#allocation4 + $0x3d0] sm:$0xff]
    %v195 = vld [vmem:[#allocation4 + $0x3d8] sm:$0xff]
    %v196 = vld [vmem:[#allocation4 + $0x3e0] sm:$0xff]
    %v197 = vld [vmem:[#allocation4 + $0x3e8] sm:$0xff]
    %v198 = vld [vmem:[#allocation4 + $0x3f0] sm:$0xff]
    %v199 = vld [vmem:[#allocation4 + $0x3f8] sm:$0xff]
    %v200 = vld [vmem:[#allocation4 + $0x400] sm:$0xff]
    %v201 = vld [vmem:[#allocation4 + $0x408] sm:$0xff]
    %v202 = vld [vmem:[#allocation4 + $0x410] sm:$0xff]
    %v203 = vld [vmem:[#allocation4 + $0x418] sm:$0xff]
    %v204 = vld [vmem:[#allocation4 + $0x420] sm:$0xff]
    %v205 = vld [vmem:[#allocation4 + $0x428] sm:$0xff]
    %v206 = vld [vmem:[#allocation4 + $0x430] sm:$0xff]
    %v207 = vld [vmem:[#allocation4 + $0x438] sm:$0xff]
    %v208 = vld [vmem:[#allocation4 + $0x440] sm:$0xff]
    %v209 = vld [vmem:[#allocation4 + $0x448] sm:$0xff]
    %v210 = vld [vmem:[#allocation4 + $0x450] sm:$0xff]
    %v211 = vld [vmem:[#allocation4 + $0x458] sm:$0xff]
    %v212 = vld [vmem:[#allocation4 + $0x460] sm:$0xff]
    %v213 = vld [vmem:[#allocation4 + $0x468] sm:$0xff]
    %v214 = vld [vmem:[#allocation4 + $0x470] sm:$0xff]
    %v215 = vld [vmem:[#allocation4 + $0x478] sm:$0xff]
    %v216 = vld [vmem:[#allocation4 + $0x480] sm:$0xff]
    %v217 = vld [vmem:[#allocation4 + $0x488] sm:$0xff]
    %v218 = vld [vmem:[#allocation4 + $0x490] sm:$0xff]
    %v219 = vld [vmem:[#allocation4 + $0x498] sm:$0xff]
    %v220 = vld [vmem:[#allocation4 + $0x4a0] sm:$0xff]
    %v221 = vld [vmem:[#allocation4 + $0x4a8] sm:$0xff]
    %v222 = vld [vmem:[#allocation4 + $0x4b0] sm:$0xff]
    %v223 = vld [vmem:[#allocation4 + $0x4b8] sm:$0xff]
    %v224 = vld [vmem:[#allocation4 + $0x4c0] sm:$0xff]
    %v225 = vld [vmem:[#allocation4 + $0x4c8] sm:$0xff]
    %v226 = vld [vmem:[#allocation4 + $0x4d0] sm:$0xff]
    %v227 = vld [vmem:[#allocation4 + $0x4d8] sm:$0xff]
    %v228 = vld [vmem:[#allocation4 + $0x4e0] sm:$0xff]
    %v229 = vld [vmem:[#allocation4 + $0x4e8] sm:$0xff]
    %v230 = vld [vmem:[#allocation4 + $0x4f0] sm:$0xff]
    %v231 = vld [vmem:[#allocation4 + $0x4f8] sm:$0xff]
    %v232 = vld [vmem:[#allocation4 + $0x500] sm:$0xff]
    %v233 = vld [vmem:[#allocation4 + $0x508] sm:$0xff]
    %v234 = vld [vmem:[#allocation4 + $0x510] sm:$0xff]
    %v235 = vld [vmem:[#allocation4 + $0x518] sm:$0xff]
    %v236 = vld [vmem:[#allocation4 + $0x520] sm:$0xff]
    %v237 = vld [vmem:[#allocation4 + $0x528] sm:$0xff]
    %v238 = vld [vmem:[#allocation4 + $0x530] sm:$0xff]
    %v239 = vld [vmem:[#allocation4 + $0x538] sm:$0xff]
    %v240 = vld [vmem:[#allocation4 + $0x540] sm:$0xff]
    %v241 = vld [vmem:[#allocation4 + $0x548] sm:$0xff]
    %v242 = vld [vmem:[#allocation4 + $0x550] sm:$0xff]
    %v243 = vld [vmem:[#allocation4 + $0x558] sm:$0xff]
    %v244 = vld [vmem:[#allocation4 + $0x560] sm:$0xff]
    %v245 = vld [vmem:[#allocation4 + $0x568] sm:$0xff]
    %v246 = vld [vmem:[#allocation4 + $0x570] sm:$0xff]
    %v247 = vld [vmem:[#allocation4 + $0x578] sm:$0xff]
    %v248 = vld [vmem:[#allocation4 + $0x580] sm:$0xff]
    %v249 = vld [vmem:[#allocation4 + $0x588] sm:$0xff]
    %v250 = vld [vmem:[#allocation4 + $0x590] sm:$0xff]
    %v251 = vld [vmem:[#allocation4 + $0x598] sm:$0xff]
    %v252 = vld [vmem:[#allocation4 + $0x5a0] sm:$0xff]
    %v253 = vld [vmem:[#allocation4 + $0x5a8] sm:$0xff]
    %v254 = vld [vmem:[#allocation4 + $0x5b0] sm:$0xff]
    %v255 = vld [vmem:[#allocation4 + $0x5b8] sm:$0xff]
    %v256 = vld [vmem:[#allocation4 + $0x5c0] sm:$0xff]
    %v257 = vld [vmem:[#allocation4 + $0x5c8] sm:$0xff]
    %v258 = vld [vmem:[#allocation4 + $0x5d0] sm:$0xff]
    %v259 = vld [vmem:[#allocation4 + $0x5d8] sm:$0xff]
    %v260 = vld [vmem:[#allocation4 + $0x5e0] sm:$0xff]
    %v261 = vld [vmem:[#allocation4 + $0x5e8] sm:$0xff]
    %v262 = vld [vmem:[#allocation4 + $0x5f0] sm:$0xff]
    %v263 = vld [vmem:[#allocation4 + $0x5f8] sm:$0xff]
    %v264 = vld [vmem:[#allocation4 + $0x600] sm:$0xff]
    %v265 = vld [vmem:[#allocation4 + $0x608] sm:$0xff]
    %v266 = vld [vmem:[#allocation4 + $0x610] sm:$0xff]
    %v267 = vld [vmem:[#allocation4 + $0x618] sm:$0xff]
    %v268 = vld [vmem:[#allocation4 + $0x620] sm:$0xff]
    %v269 = vld [vmem:[#allocation4 + $0x628] sm:$0xff]
    %v270 = vld [vmem:[#allocation4 + $0x630] sm:$0xff]
    %v271 = vld [vmem:[#allocation4 + $0x638] sm:$0xff]
    %v272 = vld [vmem:[#allocation4 + $0x640] sm:$0xff]
    %v273 = vld [vmem:[#allocation4 + $0x648] sm:$0xff]
    %v274 = vld [vmem:[#allocation4 + $0x650] sm:$0xff]
    %v275 = vld [vmem:[#allocation4 + $0x658] sm:$0xff]
    %v276 = vld [vmem:[#allocation4 + $0x660] sm:$0xff]
    %v277 = vld [vmem:[#allocation4 + $0x668] sm:$0xff]
    %v278 = vld [vmem:[#allocation4 + $0x670] sm:$0xff]
    %v279 = vld [vmem:[#allocation4 + $0x678] sm:$0xff]
    %v280 = vld [vmem:[#allocation4 + $0x680] sm:$0xff]
    %v281 = vld [vmem:[#allocation4 + $0x688] sm:$0xff]
    %v282 = vld [vmem:[#allocation4 + $0x690] sm:$0xff]
    %v283 = vld [vmem:[#allocation4 + $0x698] sm:$0xff]
    %v284 = vld [vmem:[#allocation4 + $0x6a0] sm:$0xff]
    %v285 = vld [vmem:[#allocation4 + $0x6a8] sm:$0xff]
    %v286 = vld [vmem:[#allocation4 + $0x6b0] sm:$0xff]
    %v287 = vld [vmem:[#allocation4 + $0x6b8] sm:$0xff]
    %v288 = vld [vmem:[#allocation4 + $0x6c0] sm:$0xff]
    %v289 = vld [vmem:[#allocation4 + $0x6c8] sm:$0xff]
    %v290 = vld [vmem:[#allocation4 + $0x6d0] sm:$0xff]
    %v291 = vld [vmem:[#allocation4 + $0x6d8] sm:$0xff]
    %v292 = vld [vmem:[#allocation4 + $0x6e0] sm:$0xff]
    %v293 = vld [vmem:[#allocation4 + $0x6e8] sm:$0xff]
    %v294 = vld [vmem:[#allocation4 + $0x6f0] sm:$0xff]
    %v295 = vld [vmem:[#allocation4 + $0x6f8] sm:$0xff]
    %v296 = vld [vmem:[#allocation4 + $0x700] sm:$0xff]
    %v297 = vld [vmem:[#allocation4 + $0x708] sm:$0xff]
    %v298 = vld [vmem:[#allocation4 + $0x710] sm:$0xff]
    %v299 = vld [vmem:[#allocation4 + $0x718] sm:$0xff]
    %v300 = vld [vmem:[#allocation4 + $0x720] sm:$0xff]
    %v301 = vld [vmem:[#allocation4 + $0x728] sm:$0xff]
    %v302 = vld [vmem:[#allocation4 + $0x730] sm:$0xff]
    %v303 = vld [vmem:[#allocation4 + $0x738] sm:$0xff]
    %v304 = vld [vmem:[#allocation4 + $0x740] sm:$0xff]
    %v305 = vld [vmem:[#allocation4 + $0x748] sm:$0xff]
    %v306 = vld [vmem:[#allocation4 + $0x750] sm:$0xff]
    %v307 = vld [vmem:[#allocation4 + $0x758] sm:$0xff]
    %v308 = vld [vmem:[#allocation4 + $0x760] sm:$0xff]
    %v309 = vld [vmem:[#allocation4 + $0x768] sm:$0xff]
    %v310 = vld [vmem:[#allocation4 + $0x770] sm:$0xff]
    %v311 = vld [vmem:[#allocation4 + $0x778] sm:$0xff]
    %v312 = vld [vmem:[#allocation4 + $0x780] sm:$0xff]
    %v313 = vld [vmem:[#allocation4 + $0x788] sm:$0xff]
    %v314 = vld [vmem:[#allocation4 + $0x790] sm:$0xff]
    %v315 = vld [vmem:[#allocation4 + $0x798] sm:$0xff]
    %v316 = vld [vmem:[#allocation4 + $0x7a0] sm:$0xff]
    %v317 = vld [vmem:[#allocation4 + $0x7a8] sm:$0xff]
    %v318 = vld [vmem:[#allocation4 + $0x7b0] sm:$0xff]
    %v319 = vld [vmem:[#allocation4 + $0x7b8] sm:$0xff]
    %v320 = vld [vmem:[#allocation4 + $0x7c0] sm:$0xff]
    %v321 = vld [vmem:[#allocation4 + $0x7c8] sm:$0xff]
    %v322 = vld [vmem:[#allocation4 + $0x7d0] sm:$0xff]
    %v323 = vld [vmem:[#allocation4 + $0x7d8] sm:$0xff]
    %v324 = vld [vmem:[#allocation4 + $0x7e0] sm:$0xff]
    %v325 = vld [vmem:[#allocation4 + $0x7e8] sm:$0xff]
    %v326 = vld [vmem:[#allocation4 + $0x7f0] sm:$0xff]
    %v327 = vld [vmem:[#allocation4 + $0x7f8] sm:$0xff]
    %v328 = vld [vmem:[#allocation6] sm:$0xf]
    %v330 = vlaneseq
    %v331 = vshrl.u32 %v330, 7
    %v332 = vsub.s32 0, %v331
    %v333 = vrot.slane %v71, %v332
    %v334 = vlaneseq
    %v335 = vshrl.u32 %v334, 7
    %v336 = vsub.s32 1, %v335
    %v337 = vrot.slane %v71, %v336
    %v338 = vlaneseq
    %v339 = vshrl.u32 %v338, 7
    %v340 = vsub.s32 2, %v339
    %v341 = vrot.slane %v71, %v340
    %v342 = vlaneseq
    %v343 = vshrl.u32 %v342, 7
    %v344 = vsub.s32 3, %v343
    %v345 = vrot.slane %v71, %v344
    %v351 = vlaneseq
    %v352 = vshrl.u32 %v351, 7
    %v353 = vsub.s32 0, %v352
    %v354 = vrot.slane %v328, %v353
    %v355 = vlaneseq
    %v356 = vshrl.u32 %v355, 7
    %v357 = vsub.s32 1, %v356
    %v358 = vrot.slane %v328, %v357
    %v359 = vlaneseq
    %v360 = vshrl.u32 %v359, 7
    %v361 = vsub.s32 2, %v360
    %v362 = vrot.slane %v328, %v361
    %v363 = vlaneseq
    %v364 = vshrl.u32 %v363, 7
    %v365 = vsub.s32 3, %v364
    %v366 = vrot.slane %v328, %v365
    %371 = vmatprep.subr.mxu0 %v133
    %372 = vmatpush1.msra.mxu0 %v132
    %373 = vmatprep.subr.mxu0 %v129
    %374 = vmatpush1.msra.mxu0 %v128
    %375 = vmatprep.subr.mxu0 %v125
    %376 = vmatpush1.msra.mxu0 %v124
    %377 = vmatprep.subr.mxu0 %v121
    %378 = vmatpush1.msra.mxu0 %v120
    %379 = vmatprep.subr.mxu0 %v117
    %380 = vmatpush1.msra.mxu0 %v116
    %381 = vmatprep.subr.mxu0 %v113
    %382 = vmatpush1.msra.mxu0 %v112
    %383 = vmatprep.subr.mxu0 %v109
    %384 = vmatpush1.msra.mxu0 %v108
    %385 = vmatprep.subr.mxu0 %v105
    %386 = vmatpush1.msra.mxu0 %v104
    %387 = vmatprep.subr.mxu0 %v101
    %388 = vmatpush1.msra.mxu0 %v100
    %389 = vmatprep.subr.mxu0 %v97
    %390 = vmatpush1.msra.mxu0 %v96
    %391 = vmatprep.subr.mxu0 %v93
    %392 = vmatpush1.msra.mxu0 %v92
    %393 = vmatprep.subr.mxu0 %v89
    %394 = vmatpush1.msra.mxu0 %v88
    %395 = vmatprep.subr.mxu0 %v85
    %396 = vmatpush1.msra.mxu0 %v84
    %397 = vmatprep.subr.mxu0 %v81
    %398 = vmatpush1.msra.mxu0 %v80
    %399 = vmatprep.subr.mxu0 %v77
    %400 = vmatpush1.msra.mxu0 %v76
    %401 = vmatprep.subr.mxu0 %v73
    %402 = vmatpush1.msra.mxu0 %v72
    %403 = vmatprep.subr.mxu0 %v197
    %404 = vmatpush2.msra.mxu0 %v196
    %405 = vmatprep.subr.mxu0 %v193
    %406 = vmatpush2.msra.mxu0 %v192
    %407 = vmatprep.subr.mxu0 %v189
    %408 = vmatpush2.msra.mxu0 %v188
    %409 = vmatprep.subr.mxu0 %v185
    %410 = vmatpush2.msra.mxu0 %v184
    %411 = vmatprep.subr.mxu0 %v181
    %412 = vmatpush2.msra.mxu0 %v180
    %413 = vmatprep.subr.mxu0 %v177
    %414 = vmatpush2.msra.mxu0 %v176
    %415 = vmatprep.subr.mxu0 %v173
    %416 = vmatpush2.msra.mxu0 %v172
    %417 = vmatprep.subr.mxu0 %v169
    %418 = vmatpush2.msra.mxu0 %v168
    %419 = vmatprep.subr.mxu0 %v165
    %420 = vmatpush2.msra.mxu0 %v164
    %421 = vmatprep.subr.mxu0 %v161
    %422 = vmatpush2.msra.mxu0 %v160
    %423 = vmatprep.subr.mxu0 %v157
    %424 = vmatpush2.msra.mxu0 %v156
    %425 = vmatprep.subr.mxu0 %v153
    %426 = vmatpush2.msra.mxu0 %v152
    %427 = vmatprep.subr.mxu0 %v149
    %428 = vmatpush2.msra.mxu0 %v148
    %429 = vmatprep.subr.mxu0 %v145
    %430 = vmatpush2.msra.mxu0 %v144
    %431 = vmatprep.subr.mxu0 %v141
    %432 = vmatpush2.msra.mxu0 %v140
    %433 = vmatprep.subr.mxu0 %v137
    %434 = vmatpush2.msra.mxu0 %v136
    %435 = vmatprep.mubr.f32.mxu0 %v337
    %436 = vmatmul.mubr.f32.gmra.mxu0 %v333
    %v437 = vpop.f32.mrf.mxu0
    %v438 = vadd.f32 %v354, %v437
    %v439 = vpop.f32.mrf.mxu0
    %v440 = vadd.f32 %v358, %v439
    %441 = vdwg.mxu0
    %442 = vmatprep.subr.mxu0 %v261
    %443 = vmatpush1.msra.mxu0 %v260
    %444 = vmatprep.subr.mxu0 %v257
    %445 = vmatpush1.msra.mxu0 %v256
    %446 = vmatprep.subr.mxu0 %v253
    %447 = vmatpush1.msra.mxu0 %v252
    %448 = vmatprep.subr.mxu0 %v249
    %449 = vmatpush1.msra.mxu0 %v248
    %450 = vmatprep.subr.mxu0 %v245
    %451 = vmatpush1.msra.mxu0 %v244
    %452 = vmatprep.subr.mxu0 %v241
    %453 = vmatpush1.msra.mxu0 %v240
    %454 = vmatprep.subr.mxu0 %v237
    %455 = vmatpush1.msra.mxu0 %v236
    %456 = vmatprep.subr.mxu0 %v233
    %457 = vmatpush1.msra.mxu0 %v232
    %458 = vmatprep.subr.mxu0 %v229
    %459 = vmatpush1.msra.mxu0 %v228
    %460 = vmatprep.subr.mxu0 %v225
    %461 = vmatpush1.msra.mxu0 %v224
    %462 = vmatprep.subr.mxu0 %v221
    %463 = vmatpush1.msra.mxu0 %v220
    %464 = vmatprep.subr.mxu0 %v217
    %465 = vmatpush1.msra.mxu0 %v216
    %466 = vmatprep.subr.mxu0 %v213
    %467 = vmatpush1.msra.mxu0 %v212
    %468 = vmatprep.subr.mxu0 %v209
    %469 = vmatpush1.msra.mxu0 %v208
    %470 = vmatprep.subr.mxu0 %v205
    %471 = vmatpush1.msra.mxu0 %v204
    %472 = vmatprep.subr.mxu0 %v201
    %473 = vmatpush1.msra.mxu0 %v200
    %474 = vmatprep.subr.mxu0 %v325
    %475 = vmatpush2.msra.mxu0 %v324
    %476 = vmatprep.subr.mxu0 %v321
    %477 = vmatpush2.msra.mxu0 %v320
    %478 = vmatprep.subr.mxu0 %v317
    %479 = vmatpush2.msra.mxu0 %v316
    %480 = vmatprep.subr.mxu0 %v313
    %481 = vmatpush2.msra.mxu0 %v312
    %482 = vmatprep.subr.mxu0 %v309
    %483 = vmatpush2.msra.mxu0 %v308
    %484 = vmatprep.subr.mxu0 %v305
    %485 = vmatpush2.msra.mxu0 %v304
    %486 = vmatprep.subr.mxu0 %v301
    %487 = vmatpush2.msra.mxu0 %v300
    %488 = vmatprep.subr.mxu0 %v297
    %489 = vmatpush2.msra.mxu0 %v296
    %490 = vmatprep.subr.mxu0 %v293
    %491 = vmatpush2.msra.mxu0 %v292
    %492 = vmatprep.subr.mxu0 %v289
    %493 = vmatpush2.msra.mxu0 %v288
    %494 = vmatprep.subr.mxu0 %v285
    %495 = vmatpush2.msra.mxu0 %v284
    %496 = vmatprep.subr.mxu0 %v281
    %497 = vmatpush2.msra.mxu0 %v280
    %498 = vmatprep.subr.mxu0 %v277
    %499 = vmatpush2.msra.mxu0 %v276
    %500 = vmatprep.subr.mxu0 %v273
    %501 = vmatpush2.msra.mxu0 %v272
    %502 = vmatprep.subr.mxu0 %v269
    %503 = vmatpush2.msra.mxu0 %v268
    %504 = vmatprep.subr.mxu0 %v265
    %505 = vmatpush2.msra.mxu0 %v264
    %506 = vmatprep.mubr.f32.mxu0 %v345
    %507 = vmatmul.mubr.f32.gmra.mxu0 %v341
    %v508 = vpop.f32.mrf.mxu0
    %v509 = vadd.f32 %v438, %v508
    %v510 = vpop.f32.mrf.mxu0
    %v511 = vadd.f32 %v440, %v510
    %512 = vdwg.mxu0
    %513 = vmatprep.subr.mxu0 %v135
    %514 = vmatpush1.msra.mxu0 %v134
    %515 = vmatprep.subr.mxu0 %v131
    %516 = vmatpush1.msra.mxu0 %v130
    %517 = vmatprep.subr.mxu0 %v127
    %518 = vmatpush1.msra.mxu0 %v126
    %519 = vmatprep.subr.mxu0 %v123
    %520 = vmatpush1.msra.mxu0 %v122
    %521 = vmatprep.subr.mxu0 %v119
    %522 = vmatpush1.msra.mxu0 %v118
    %523 = vmatprep.subr.mxu0 %v115
    %524 = vmatpush1.msra.mxu0 %v114
    %525 = vmatprep.subr.mxu0 %v111
    %526 = vmatpush1.msra.mxu0 %v110
    %527 = vmatprep.subr.mxu0 %v107
    %528 = vmatpush1.msra.mxu0 %v106
    %529 = vmatprep.subr.mxu0 %v103
    %530 = vmatpush1.msra.mxu0 %v102
    %531 = vmatprep.subr.mxu0 %v99
    %532 = vmatpush1.msra.mxu0 %v98
    %533 = vmatprep.subr.mxu0 %v95
    %534 = vmatpush1.msra.mxu0 %v94
    %535 = vmatprep.subr.mxu0 %v91
    %536 = vmatpush1.msra.mxu0 %v90
    %537 = vmatprep.subr.mxu0 %v87
    %538 = vmatpush1.msra.mxu0 %v86
    %539 = vmatprep.subr.mxu0 %v83
    %540 = vmatpush1.msra.mxu0 %v82
    %541 = vmatprep.subr.mxu0 %v79
    %542 = vmatpush1.msra.mxu0 %v78
    %543 = vmatprep.subr.mxu0 %v75
    %544 = vmatpush1.msra.mxu0 %v74
    %545 = vmatprep.subr.mxu0 %v199
    %546 = vmatpush2.msra.mxu0 %v198
    %547 = vmatprep.subr.mxu0 %v195
    %548 = vmatpush2.msra.mxu0 %v194
    %549 = vmatprep.subr.mxu0 %v191
    %550 = vmatpush2.msra.mxu0 %v190
    %551 = vmatprep.subr.mxu0 %v187
    %552 = vmatpush2.msra.mxu0 %v186
    %553 = vmatprep.subr.mxu0 %v183
    %554 = vmatpush2.msra.mxu0 %v182
    %555 = vmatprep.subr.mxu0 %v179
    %556 = vmatpush2.msra.mxu0 %v178
    %557 = vmatprep.subr.mxu0 %v175
    %558 = vmatpush2.msra.mxu0 %v174
    %559 = vmatprep.subr.mxu0 %v171
    %560 = vmatpush2.msra.mxu0 %v170
    %561 = vmatprep.subr.mxu0 %v167
    %562 = vmatpush2.msra.mxu0 %v166
    %563 = vmatprep.subr.mxu0 %v163
    %564 = vmatpush2.msra.mxu0 %v162
    %565 = vmatprep.subr.mxu0 %v159
    %566 = vmatpush2.msra.mxu0 %v158
    %567 = vmatprep.subr.mxu0 %v155
    %568 = vmatpush2.msra.mxu0 %v154
    %569 = vmatprep.subr.mxu0 %v151
    %570 = vmatpush2.msra.mxu0 %v150
    %571 = vmatprep.subr.mxu0 %v147
    %572 = vmatpush2.msra.mxu0 %v146
    %573 = vmatprep.subr.mxu0 %v143
    %574 = vmatpush2.msra.mxu0 %v142
    %575 = vmatprep.subr.mxu0 %v139
    %576 = vmatpush2.msra.mxu0 %v138
    %577 = vmatprep.mubr.f32.mxu0 %v337
    %578 = vmatmul.mubr.f32.gmra.mxu0 %v333
    %v579 = vpop.f32.mrf.mxu0
    %v580 = vadd.f32 %v362, %v579
    %v581 = vpop.f32.mrf.mxu0
    %v582 = vadd.f32 %v366, %v581
    %583 = vdwg.mxu0
    %584 = vmatprep.subr.mxu0 %v263
    %585 = vmatpush1.msra.mxu0 %v262
    %586 = vmatprep.subr.mxu0 %v259
    %587 = vmatpush1.msra.mxu0 %v258
    %588 = vmatprep.subr.mxu0 %v255
    %589 = vmatpush1.msra.mxu0 %v254
    %590 = vmatprep.subr.mxu0 %v251
    %591 = vmatpush1.msra.mxu0 %v250
    %592 = vmatprep.subr.mxu0 %v247
    %593 = vmatpush1.msra.mxu0 %v246
    %594 = vmatprep.subr.mxu0 %v243
    %595 = vmatpush1.msra.mxu0 %v242
    %596 = vmatprep.subr.mxu0 %v239
    %597 = vmatpush1.msra.mxu0 %v238
    %598 = vmatprep.subr.mxu0 %v235
    %599 = vmatpush1.msra.mxu0 %v234
    %600 = vmatprep.subr.mxu0 %v231
    %601 = vmatpush1.msra.mxu0 %v230
    %602 = vmatprep.subr.mxu0 %v227
    %603 = vmatpush1.msra.mxu0 %v226
    %604 = vmatprep.subr.mxu0 %v223
    %605 = vmatpush1.msra.mxu0 %v222
    %606 = vmatprep.subr.mxu0 %v219
    %607 = vmatpush1.msra.mxu0 %v218
    %608 = vmatprep.subr.mxu0 %v215
    %609 = vmatpush1.msra.mxu0 %v214
    %610 = vmatprep.subr.mxu0 %v211
    %611 = vmatpush1.msra.mxu0 %v210
    %612 = vmatprep.subr.mxu0 %v207
    %613 = vmatpush1.msra.mxu0 %v206
    %614 = vmatprep.subr.mxu0 %v203
    %615 = vmatpush1.msra.mxu0 %v202
    %616 = vmatprep.subr.mxu0 %v327
    %617 = vmatpush2.msra.mxu0 %v326
    %618 = vmatprep.subr.mxu0 %v323
    %619 = vmatpush2.msra.mxu0 %v322
    %620 = vmatprep.subr.mxu0 %v319
    %621 = vmatpush2.msra.mxu0 %v318
    %622 = vmatprep.subr.mxu0 %v315
    %623 = vmatpush2.msra.mxu0 %v314
    %624 = vmatprep.subr.mxu0 %v311
    %625 = vmatpush2.msra.mxu0 %v310
    %626 = vmatprep.subr.mxu0 %v307
    %627 = vmatpush2.msra.mxu0 %v306
    %628 = vmatprep.subr.mxu0 %v303
    %629 = vmatpush2.msra.mxu0 %v302
    %630 = vmatprep.subr.mxu0 %v299
    %631 = vmatpush2.msra.mxu0 %v298
    %632 = vmatprep.subr.mxu0 %v295
    %633 = vmatpush2.msra.mxu0 %v294
    %634 = vmatprep.subr.mxu0 %v291
    %635 = vmatpush2.msra.mxu0 %v290
    %636 = vmatprep.subr.mxu0 %v287
    %637 = vmatpush2.msra.mxu0 %v286
    %638 = vmatprep.subr.mxu0 %v283
    %639 = vmatpush2.msra.mxu0 %v282
    %640 = vmatprep.subr.mxu0 %v279
    %641 = vmatpush2.msra.mxu0 %v278
    %642 = vmatprep.subr.mxu0 %v275
    %643 = vmatpush2.msra.mxu0 %v274
    %644 = vmatprep.subr.mxu0 %v271
    %645 = vmatpush2.msra.mxu0 %v270
    %646 = vmatprep.subr.mxu0 %v267
    %647 = vmatpush2.msra.mxu0 %v266
    %648 = vmatprep.mubr.f32.mxu0 %v345
    %649 = vmatmul.mubr.f32.gmra.mxu0 %v341
    %v650 = vpop.f32.mrf.mxu0
    %v651 = vadd.f32 %v580, %v650
    %v652 = vpop.f32.mrf.mxu0
    %v653 = vadd.f32 %v582, %v652
    %654 = vdwg.mxu0
    %v655 = vmax.f32 %v509, 0.0
    %v656 = vmax.f32 %v511, 0.0
    %v657 = vmax.f32 %v651, 0.0
    %v658 = vmax.f32 %v653, 0.0
    %v659 = vld [vmem:[#allocation7] sm:$0xff]
    %v660 = vld [vmem:[#allocation7 + $0x8] sm:$0xff]
    %v661 = vld [vmem:[#allocation7 + $0x10] sm:$0xff]
    %v662 = vld [vmem:[#allocation7 + $0x18] sm:$0xff]
    %v663 = vld [vmem:[#allocation7 + $0x20] sm:$0xff]
    %v664 = vld [vmem:[#allocation7 + $0x28] sm:$0xff]
    %v665 = vld [vmem:[#allocation7 + $0x30] sm:$0xff]
    %v666 = vld [vmem:[#allocation7 + $0x38] sm:$0xff]
    %v667 = vld [vmem:[#allocation7 + $0x40] sm:$0xff]
    %v668 = vld [vmem:[#allocation7 + $0x48] sm:$0xff]
    %v669 = vld [vmem:[#allocation7 + $0x50] sm:$0xff]
    %v670 = vld [vmem:[#allocation7 + $0x58] sm:$0xff]
    %v671 = vld [vmem:[#allocation7 + $0x60] sm:$0xff]
    %v672 = vld [vmem:[#allocation7 + $0x68] sm:$0xff]
    %v673 = vld [vmem:[#allocation7 + $0x70] sm:$0xff]
    %v674 = vld [vmem:[#allocation7 + $0x78] sm:$0xff]
    %v675 = vld [vmem:[#allocation7 + $0x80] sm:$0xff]
    %v676 = vld [vmem:[#allocation7 + $0x88] sm:$0xff]
    %v677 = vld [vmem:[#allocation7 + $0x90] sm:$0xff]
    %v678 = vld [vmem:[#allocation7 + $0x98] sm:$0xff]
    %v679 = vld [vmem:[#allocation7 + $0xa0] sm:$0xff]
    %v680 = vld [vmem:[#allocation7 + $0xa8] sm:$0xff]
    %v681 = vld [vmem:[#allocation7 + $0xb0] sm:$0xff]
    %v682 = vld [vmem:[#allocation7 + $0xb8] sm:$0xff]
    %v683 = vld [vmem:[#allocation7 + $0xc0] sm:$0xff]
    %v684 = vld [vmem:[#allocation7 + $0xc8] sm:$0xff]
    %v685 = vld [vmem:[#allocation7 + $0xd0] sm:$0xff]
    %v686 = vld [vmem:[#allocation7 + $0xd8] sm:$0xff]
    %v687 = vld [vmem:[#allocation7 + $0xe0] sm:$0xff]
    %v688 = vld [vmem:[#allocation7 + $0xe8] sm:$0xff]
    %v689 = vld [vmem:[#allocation7 + $0xf0] sm:$0xff]
    %v690 = vld [vmem:[#allocation7 + $0xf8] sm:$0xff]
    %v691 = vld [vmem:[#allocation7 + $0x100] sm:$0xff]
    %v692 = vld [vmem:[#allocation7 + $0x108] sm:$0xff]
    %v693 = vld [vmem:[#allocation7 + $0x110] sm:$0xff]
    %v694 = vld [vmem:[#allocation7 + $0x118] sm:$0xff]
    %v695 = vld [vmem:[#allocation7 + $0x120] sm:$0xff]
    %v696 = vld [vmem:[#allocation7 + $0x128] sm:$0xff]
    %v697 = vld [vmem:[#allocation7 + $0x130] sm:$0xff]
    %v698 = vld [vmem:[#allocation7 + $0x138] sm:$0xff]
    %v699 = vld [vmem:[#allocation7 + $0x140] sm:$0xff]
    %v700 = vld [vmem:[#allocation7 + $0x148] sm:$0xff]
    %v701 = vld [vmem:[#allocation7 + $0x150] sm:$0xff]
    %v702 = vld [vmem:[#allocation7 + $0x158] sm:$0xff]
    %v703 = vld [vmem:[#allocation7 + $0x160] sm:$0xff]
    %v704 = vld [vmem:[#allocation7 + $0x168] sm:$0xff]
    %v705 = vld [vmem:[#allocation7 + $0x170] sm:$0xff]
    %v706 = vld [vmem:[#allocation7 + $0x178] sm:$0xff]
    %v707 = vld [vmem:[#allocation7 + $0x180] sm:$0xff]
    %v708 = vld [vmem:[#allocation7 + $0x188] sm:$0xff]
    %v709 = vld [vmem:[#allocation7 + $0x190] sm:$0xff]
    %v710 = vld [vmem:[#allocation7 + $0x198] sm:$0xff]
    %v711 = vld [vmem:[#allocation7 + $0x1a0] sm:$0xff]
    %v712 = vld [vmem:[#allocation7 + $0x1a8] sm:$0xff]
    %v713 = vld [vmem:[#allocation7 + $0x1b0] sm:$0xff]
    %v714 = vld [vmem:[#allocation7 + $0x1b8] sm:$0xff]
    %v715 = vld [vmem:[#allocation7 + $0x1c0] sm:$0xff]
    %v716 = vld [vmem:[#allocation7 + $0x1c8] sm:$0xff]
    %v717 = vld [vmem:[#allocation7 + $0x1d0] sm:$0xff]
    %v718 = vld [vmem:[#allocation7 + $0x1d8] sm:$0xff]
    %v719 = vld [vmem:[#allocation7 + $0x1e0] sm:$0xff]
    %v720 = vld [vmem:[#allocation7 + $0x1e8] sm:$0xff]
    %v721 = vld [vmem:[#allocation7 + $0x1f0] sm:$0xff]
    %v722 = vld [vmem:[#allocation7 + $0x1f8] sm:$0xff]
    %v723 = vld [vmem:[%s4] sm:$0x1]
    %724 = vmatprep.subr.mxu0 0.0
    %725 = vmatpush1.msra.mxu0 %v674
    %726 = vmatprep.subr.mxu0 0.0
    %727 = vmatpush1.msra.mxu0 %v673
    %728 = vmatprep.subr.mxu0 0.0
    %729 = vmatpush1.msra.mxu0 %v672
    %730 = vmatprep.subr.mxu0 0.0
    %731 = vmatpush1.msra.mxu0 %v671
    %732 = vmatprep.subr.mxu0 0.0
    %733 = vmatpush1.msra.mxu0 %v670
    %734 = vmatprep.subr.mxu0 0.0
    %735 = vmatpush1.msra.mxu0 %v669
    %736 = vmatprep.subr.mxu0 0.0
    %737 = vmatpush1.msra.mxu0 %v668
    %738 = vmatprep.subr.mxu0 0.0
    %739 = vmatpush1.msra.mxu0 %v667
    %740 = vmatprep.subr.mxu0 0.0
    %741 = vmatpush1.msra.mxu0 %v666
    %742 = vmatprep.subr.mxu0 0.0
    %743 = vmatpush1.msra.mxu0 %v665
    %744 = vmatprep.subr.mxu0 0.0
    %745 = vmatpush1.msra.mxu0 %v664
    %746 = vmatprep.subr.mxu0 0.0
    %747 = vmatpush1.msra.mxu0 %v663
    %748 = vmatprep.subr.mxu0 0.0
    %749 = vmatpush1.msra.mxu0 %v662
    %750 = vmatprep.subr.mxu0 0.0
    %751 = vmatpush1.msra.mxu0 %v661
    %752 = vmatprep.subr.mxu0 0.0
    %753 = vmatpush1.msra.mxu0 %v660
    %754 = vmatprep.subr.mxu0 0.0
    %755 = vmatpush1.msra.mxu0 %v659
    %756 = vmatprep.subr.mxu0 0.0
    %757 = vmatpush2.msra.mxu0 %v690
    %758 = vmatprep.subr.mxu0 0.0
    %759 = vmatpush2.msra.mxu0 %v689
    %760 = vmatprep.subr.mxu0 0.0
    %761 = vmatpush2.msra.mxu0 %v688
    %762 = vmatprep.subr.mxu0 0.0
    %763 = vmatpush2.msra.mxu0 %v687
    %764 = vmatprep.subr.mxu0 0.0
    %765 = vmatpush2.msra.mxu0 %v686
    %766 = vmatprep.subr.mxu0 0.0
    %767 = vmatpush2.msra.mxu0 %v685
    %768 = vmatprep.subr.mxu0 0.0
    %769 = vmatpush2.msra.mxu0 %v684
    %770 = vmatprep.subr.mxu0 0.0
    %771 = vmatpush2.msra.mxu0 %v683
    %772 = vmatprep.subr.mxu0 0.0
    %773 = vmatpush2.msra.mxu0 %v682
    %774 = vmatprep.subr.mxu0 0.0
    %775 = vmatpush2.msra.mxu0 %v681
    %776 = vmatprep.subr.mxu0 0.0
    %777 = vmatpush2.msra.mxu0 %v680
    %778 = vmatprep.subr.mxu0 0.0
    %779 = vmatpush2.msra.mxu0 %v679
    %780 = vmatprep.subr.mxu0 0.0
    %781 = vmatpush2.msra.mxu0 %v678
    %782 = vmatprep.subr.mxu0 0.0
    %783 = vmatpush2.msra.mxu0 %v677
    %784 = vmatprep.subr.mxu0 0.0
    %785 = vmatpush2.msra.mxu0 %v676
    %786 = vmatprep.subr.mxu0 0.0
    %787 = vmatpush2.msra.mxu0 %v675
    %788 = vmatprep.mubr.f32.mxu0 %v656
    %789 = vmatmul.mubr.f32.gmra.mxu0 %v655
    %v790 = vpop.f32.mrf.mxu0
    %v791 = vadd.f32 %v723, %v790
    %v792 = vpop.f32.mrf.mxu0
    %793 = vdwg.mxu0
    %794 = vmatprep.subr.mxu0 0.0
    %795 = vmatpush1.msra.mxu0 %v706
    %796 = vmatprep.subr.mxu0 0.0
    %797 = vmatpush1.msra.mxu0 %v705
    %798 = vmatprep.subr.mxu0 0.0
    %799 = vmatpush1.msra.mxu0 %v704
    %800 = vmatprep.subr.mxu0 0.0
    %801 = vmatpush1.msra.mxu0 %v703
    %802 = vmatprep.subr.mxu0 0.0
    %803 = vmatpush1.msra.mxu0 %v702
    %804 = vmatprep.subr.mxu0 0.0
    %805 = vmatpush1.msra.mxu0 %v701
    %806 = vmatprep.subr.mxu0 0.0
    %807 = vmatpush1.msra.mxu0 %v700
    %808 = vmatprep.subr.mxu0 0.0
    %809 = vmatpush1.msra.mxu0 %v699
    %810 = vmatprep.subr.mxu0 0.0
    %811 = vmatpush1.msra.mxu0 %v698
    %812 = vmatprep.subr.mxu0 0.0
    %813 = vmatpush1.msra.mxu0 %v697
    %814 = vmatprep.subr.mxu0 0.0
    %815 = vmatpush1.msra.mxu0 %v696
    %816 = vmatprep.subr.mxu0 0.0
    %817 = vmatpush1.msra.mxu0 %v695
    %818 = vmatprep.subr.mxu0 0.0
    %819 = vmatpush1.msra.mxu0 %v694
    %820 = vmatprep.subr.mxu0 0.0
    %821 = vmatpush1.msra.mxu0 %v693
    %822 = vmatprep.subr.mxu0 0.0
    %823 = vmatpush1.msra.mxu0 %v692
    %824 = vmatprep.subr.mxu0 0.0
    %825 = vmatpush1.msra.mxu0 %v691
    %826 = vmatprep.subr.mxu0 0.0
    %827 = vmatpush2.msra.mxu0 %v722
    %828 = vmatprep.subr.mxu0 0.0
    %829 = vmatpush2.msra.mxu0 %v721
    %830 = vmatprep.subr.mxu0 0.0
    %831 = vmatpush2.msra.mxu0 %v720
    %832 = vmatprep.subr.mxu0 0.0
    %833 = vmatpush2.msra.mxu0 %v719
    %834 = vmatprep.subr.mxu0 0.0
    %835 = vmatpush2.msra.mxu0 %v718
    %836 = vmatprep.subr.mxu0 0.0
    %837 = vmatpush2.msra.mxu0 %v717
    %838 = vmatprep.subr.mxu0 0.0
    %839 = vmatpush2.msra.mxu0 %v716
    %840 = vmatprep.subr.mxu0 0.0
    %841 = vmatpush2.msra.mxu0 %v715
    %842 = vmatprep.subr.mxu0 0.0
    %843 = vmatpush2.msra.mxu0 %v714
    %844 = vmatprep.subr.mxu0 0.0
    %845 = vmatpush2.msra.mxu0 %v713
    %846 = vmatprep.subr.mxu0 0.0
    %847 = vmatpush2.msra.mxu0 %v712
    %848 = vmatprep.subr.mxu0 0.0
    %849 = vmatpush2.msra.mxu0 %v711
    %850 = vmatprep.subr.mxu0 0.0
    %851 = vmatpush2.msra.mxu0 %v710
    %852 = vmatprep.subr.mxu0 0.0
    %853 = vmatpush2.msra.mxu0 %v709
    %854 = vmatprep.subr.mxu0 0.0
    %855 = vmatpush2.msra.mxu0 %v708
    %856 = vmatprep.subr.mxu0 0.0
    %857 = vmatpush2.msra.mxu0 %v707
    %858 = vmatprep.mubr.f32.mxu0 %v658
    %859 = vmatmul.mubr.f32.gmra.mxu0 %v657
    %v860 = vpop.f32.mrf.mxu0
    %v861 = vadd.f32 %v791, %v860
    %v862 = vpop.f32.mrf.mxu0
    %863 = vdwg.mxu0
    %864 = vst [vmem:[%s5] sm:$0x1] %v861
    // Predicated region
    $region38: #{fwd.1} parent=1 // pred_check
      _
    $region39: #{fwd.1} parent=1 // pred_check_branch
      %866 = sbr.rel (0) target = $region41
    $region40: #{fwd.1} parent=1 // pred_region
      _
    $region41: #{fwd.1} parent=1 // pred_fallthru
      _
    // Predicated region
    $region42: #{fwd.1} parent=1 // pred_check
      _
    $region43: #{fwd.1} parent=1 // pred_check_branch
      %868 = sbr.rel (0) target = $region45
    $region44: #{fwd.1} parent=1 // pred_region
      _
    $region45: #{fwd.1} parent=1 // pred_fallthru
      _
    %869 = vsyncpa [#allocation3], 1
    %870 = vsyncpa [#allocation5], 1
    %871 = vsyncpa [#allocation8], 1

</llo_original>
